<compile_context>
chip_gen: v6e
topology: v6e:2x2x1
jax: 0.10.0
libtpu: 0.0.40
codegen_flags: <defaults>
</compile_context>

<pallas_src>
import jax
import jax.numpy as jnp
from jax.experimental import pallas as pl
from jax.experimental.pallas import tpu as pltpu


def _round_up(x, m):
    return ((x + m - 1) // m) * m


def _kmeans_dist_kernel(x_ref, ct_ref, csq_ref, o_ref):
    """One (batch, K) tile: d = sqrt(max(||x||^2 + ||c||^2 - 2 x.c, 0))."""
    x = x_ref[...]                                            # (TB, F)
    xf = x.astype(jnp.float32)
    x_sq = jnp.sum(xf * xf, axis=-1, keepdims=True)           # (TB, 1) f32
    # Cross term on the MXU; RHS already presented as (F, TK) so no in-kernel
    # transpose is needed.  f32 accumulate regardless of input dtype.
    xc = jnp.dot(x, ct_ref[...], preferred_element_type=jnp.float32)  # (TB, TK)
    d2 = jnp.maximum(x_sq + csq_ref[...] - 2.0 * xc, 0.0)
    o_ref[...] = jnp.sqrt(d2).astype(o_ref.dtype)


def _vmem_budget():
    """(working budget for tiles, vmem_limit_bytes) - generation aware."""
    try:
        cap = int(pltpu.get_tpu_info().vmem_capacity_bytes)
    except Exception:
        cap = 64 * 1024 * 1024        # conservative fallback (v7x-sized)
    # ~half of physical VMEM for pipeline buffers: ~32 MiB on v7x,
    # ~64 MiB on v5e/v6e.
    budget = max(16 * 1024 * 1024, min(64 * 1024 * 1024, cap // 2))
    limit = int(min(cap - 4 * 1024 * 1024, budget + budget // 4))
    return budget, limit


def _choose_tiles(batch, num_features, k_pad, budget):
    """Pick (tb, tk, centroid_buffer_count) so everything fits `budget`."""
    bpe = 4  # account in f32 (conservative for bf16 inputs)

    # K tile: keep the transposed centroid block resident (single buffer) if
    # it fits in ~half the budget; otherwise tile K (double-buffered).
    if num_features * k_pad * bpe <= budget // 2:
        tk, cbufs = k_pad, 1
    else:
        tk = ((budget // 2) // (2 * num_features * bpe) // 128) * 128
        tk = min(k_pad, max(128, tk))
        cbufs = 2

    # Batch tile from what remains; x and out tiles are double-buffered.
    rem = budget - cbufs * num_features * tk * bpe - 2 * tk * bpe
    per_row = 2 * (num_features + tk) * bpe
    tb = max(8, rem // per_row)
    tb = min(tb, 1024)
    if tb >= 256:
        tb = (tb // 256) * 256          # full MXU passes / clean DMA
    elif tb >= 128:
        tb = 128
    else:
        tb = max(8, (tb // 8) * 8)

    # v7x: ensure >= 2 batch grid steps for large batches so both TensorCores
    # get work (harmless on v5e/v6e).
    if batch >= 256:
        tb = min(tb, _round_up(pl.cdiv(batch, 2), 128))

    # Never allocate a tile much larger than the data.
    tb = min(tb, _round_up(batch, 8))
    tb = max(8, (tb // 8) * 8)
    return int(tb), int(tk), cbufs


def kmeans_distances(x, centroids, *, tile_batch=None):
    """Pallas equivalent of KMeansLayer.forward.

    Args:
      x:          (batch, num_features)
      centroids:  (num_clusters, num_features)
    Returns:
      distances:  (batch, num_clusters), same dtype as the promoted inputs.
    """
    batch, num_features = x.shape
    num_clusters, nf2 = centroids.shape
    assert nf2 == num_features

    dtype = jnp.promote_types(x.dtype, centroids.dtype)
    x = x.astype(dtype)
    centroids = centroids.astype(dtype)

    # Lane-dense output: pad clusters to a multiple of 128.
    k_pad = max(_round_up(num_clusters, 128), 128)

    budget, vmem_limit = _vmem_budget()
    tb, tk, cbufs = _choose_tiles(batch, num_features, k_pad, budget)
    if tile_batch is not None:
        tb = max(8, (int(tile_batch) // 8) * 8)

    # Pad clusters only; the batch axis is handled by a cdiv grid with a
    # masked partial last tile (no extra HBM copy of x or the output rows).
    c_p = centroids
    if k_pad != num_clusters:
        c_p = jnp.pad(c_p, ((0, k_pad - num_clusters), (0, 0)))

    # Hoist centroid-only work out of the per-tile loop.
    c_fk = jnp.transpose(c_p)                                        # (F, K_pad)
    c_sq = jnp.sum(c_p.astype(jnp.float32) ** 2, axis=-1)[None, :]   # (1, K_pad) f32

    nb = pl.cdiv(batch, tb)
    nk = pl.cdiv(k_pad, tk)
    resident_centroids = (nk == 1)

    if resident_centroids:
        # Block index never changes -> single buffer frees F*K_pad*4 bytes.
        ct_spec = pl.BlockSpec((num_features, tk), lambda i, j: (0, j),
                               pipeline_mode=pl.Buffered(1))
        csq_spec = pl.BlockSpec((1, tk), lambda i, j: (0, j),
                                pipeline_mode=pl.Buffered(1))
    else:
        ct_spec = pl.BlockSpec((num_features, tk), lambda i, j: (0, j))
        csq_spec = pl.BlockSpec((1, tk), lambda i, j: (0, j))

    itemsize = jnp.dtype(dtype).itemsize
    centroid_passes = 1 if resident_centroids else nb
    cost = pl.CostEstimate(
        flops=2 * batch * k_pad * num_features,
        transcendentals=batch * k_pad,  # sqrt
        bytes_accessed=(itemsize * batch * num_features
                        + itemsize * num_features * k_pad * centroid_passes
                        + 4 * k_pad
                        + itemsize * batch * k_pad),
    )

    out = pl.pallas_call(
        _kmeans_dist_kernel,
        out_shape=jax.ShapeDtypeStruct((batch, k_pad), dtype),
        grid_spec=pltpu.PrefetchScalarGridSpec(
            num_scalar_prefetch=0,
            grid=(nb, nk),
            in_specs=[
                pl.BlockSpec((tb, num_features), lambda i, j: (i, 0)),
                ct_spec,
                csq_spec,
            ],
            out_specs=pl.BlockSpec((tb, tk), lambda i, j: (i, j)),
        ),
        compiler_params=pltpu.CompilerParams(
            dimension_semantics=("parallel", "parallel"),
            vmem_limit_bytes=vmem_limit,
        ),
        cost_estimate=cost,
    )(x, c_fk, c_sq)

    if k_pad != num_clusters:
        out = out[:, :num_clusters]
    return out


if __name__ == "__main__":
    key = jax.random.PRNGKey(0)

    # Case 1: module-consistent small shapes.
    num_clusters, num_features, batch = 4, 32, 8
    k_x, k_c, key = jax.random.split(key, 3)
    x = jax.random.normal(k_x, (batch, num_features), dtype=jnp.float32)
    centroids = jax.random.normal(k_c, (num_clusters, num_features),
                                  dtype=jnp.float32)
    out = jax.block_until_ready(kmeans_distances(x, centroids))
    ref = jnp.linalg.norm(x[:, None, :] - centroids[None, :, :], axis=2)
    assert out.shape == (batch, num_clusters)
    assert jnp.allclose(out, ref, atol=1e-4, rtol=1e-4)

    # Case 2: exercise the partial-batch-tile and cluster-padding paths.
    num_clusters2, num_features2, batch2 = 5, 48, 13
    k_x2, k_c2 = jax.random.split(key)
    x2 = jax.random.normal(k_x2, (batch2, num_features2), dtype=jnp.float32)
    c2 = jax.random.normal(k_c2, (num_clusters2, num_features2),
                           dtype=jnp.float32)
    out2 = jax.block_until_ready(kmeans_distances(x2, c2))
    ref2 = jnp.linalg.norm(x2[:, None, :] - c2[None, :, :], axis=2)
    assert out2.shape == (batch2, num_clusters2)
    assert jnp.allclose(out2, ref2, atol=1e-4, rtol=1e-4)

    print("KERNEL_OK")
</pallas_src>

<mosaic_0001>
module attributes {stable_mosaic.version = 11 : i64} {
  func.func @_kmeans_dist_kernel(%arg0: i32, %arg1: i32, %arg2: memref<8x32xf32, #tpu.memory_space<vmem>>, %arg3: memref<32x128xf32, #tpu.memory_space<vmem>>, %arg4: memref<1x128xf32, #tpu.memory_space<vmem>>, %arg5: memref<8x128xf32, #tpu.memory_space<vmem>>) attributes {dimension_semantics = [#tpu.dimension_semantics<parallel>, #tpu.dimension_semantics<parallel>], iteration_bounds = array<i64: 1, 1>, scalar_prefetch = 0 : i64, scratch_operands = 0 : i64, tpu.core_type = #tpu.core_type<tc>, window_params = [{transform_indices = @transform_0, window_bounds = array<i64: 8, 32>}, {pipeline_mode = #tpu.pipeline_mode<synchronous>, transform_indices = @transform_1, window_bounds = array<i64: 32, 128>}, {pipeline_mode = #tpu.pipeline_mode<synchronous>, transform_indices = @transform_2, window_bounds = array<i64: 1, 128>}, {transform_indices = @transform_3, window_bounds = array<i64: 8, 128>}]} {
    %c0 = arith.constant 0 : index
    %c0_0 = arith.constant 0 : index
    %0 = vector.load %arg2[%c0, %c0_0] : memref<8x32xf32, #tpu.memory_space<vmem>>, vector<8x32xf32>
    %1 = arith.mulf %0, %0 : vector<8x32xf32>
    %cst = arith.constant dense<0.000000e+00> : vector<8xf32>
    %2 = vector.multi_reduction <add>, %1, %cst [1] : vector<8x32xf32> to vector<8xf32>
    %3 = vector.shape_cast %2 : vector<8xf32> to vector<8x1xf32>
    %c0_1 = arith.constant 0 : index
    %c0_2 = arith.constant 0 : index
    %4 = vector.load %arg3[%c0_1, %c0_2] : memref<32x128xf32, #tpu.memory_space<vmem>>, vector<32x128xf32>
    %cst_3 = arith.constant dense<0.000000e+00> : vector<8x128xf32>
    %5 = tpu.matmul %0, %4, %cst_3 {dimension_numbers = #tpu.dot_dimension_numbers<[1], [0], [0], [1], [0, 0, 1, 1], [], []>} : vector<8x32xf32>, vector<32x128xf32>, vector<8x128xf32> -> vector<8x128xf32>
    %c0_4 = arith.constant 0 : index
    %c0_5 = arith.constant 0 : index
    %6 = vector.load %arg4[%c0_4, %c0_5] : memref<1x128xf32, #tpu.memory_space<vmem>>, vector<1x128xf32>
    %7 = vector.broadcast %3 : vector<8x1xf32> to vector<8x128xf32>
    %8 = vector.broadcast %6 : vector<1x128xf32> to vector<8x128xf32>
    %9 = arith.addf %7, %8 : vector<8x128xf32>
    %cst_6 = arith.constant 2.000000e+00 : f32
    %10 = vector.broadcast %cst_6 : f32 to vector<8x128xf32>
    %11 = arith.mulf %10, %5 : vector<8x128xf32>
    %12 = arith.subf %9, %11 : vector<8x128xf32>
    %cst_7 = arith.constant 0.000000e+00 : f32
    %13 = vector.broadcast %cst_7 : f32 to vector<8x128xf32>
    %14 = arith.maximumf %12, %13 : vector<8x128xf32>
    %15 = math.sqrt %14 : vector<8x128xf32>
    %c0_8 = arith.constant 0 : index
    %c0_9 = arith.constant 0 : index
    %16 = vector.load %arg5[%c0_8, %c0_9] : memref<8x128xf32, #tpu.memory_space<vmem>>, vector<8x128xf32>
    tpu.vector_store %arg5[%c0_8, %c0_9], %15 {strides = array<i32>} : memref<8x128xf32, #tpu.memory_space<vmem>>, vector<8x128xf32>,
    return
  }
  func.func @transform_0(%arg0: i32, %arg1: i32) -> (i32, i32) {
    %c0_i32 = arith.constant 0 : i32
    %c0_i32_0 = arith.constant 0 : i32
    return %arg0, %c0_i32 : i32, i32
  }
  func.func @transform_1(%arg0: i32, %arg1: i32) -> (i32, i32) {
    %c0_i32 = arith.constant 0 : i32
    %c0_i32_0 = arith.constant 0 : i32
    return %c0_i32, %arg1 : i32, i32
  }
  func.func @transform_2(%arg0: i32, %arg1: i32) -> (i32, i32) {
    %c0_i32 = arith.constant 0 : i32
    %c0_i32_0 = arith.constant 0 : i32
    return %c0_i32, %arg1 : i32, i32
  }
  func.func @transform_3(%arg0: i32, %arg1: i32) -> (i32, i32) {
    %c0_i32 = arith.constant 0 : i32
    return %arg0, %arg1 : i32, i32
  }
}

</mosaic_0001>

<llo_original>
// kernel: tpu_custom_call.1
$region0: #{tpu_custom_call.1}
  #allocation0 [shape = 'u32[]', space=smem, size = 0x4, offset = 0x4, fixed_abs, tag = 'smem constant byte address 0x4 - core index']
  #allocation1 [shape = 'u32[144,128]{1,0:T(1,128)}', space=vmem, size = 0x12000, scoped, tag = 'internal scratch']
  %s0 = inlined_call_operand.hbm [shape: f32[8,32], index: 0, kind: input, shape index: {}]
  %s1 = inlined_call_operand.hbm [shape: f32[32,128], index: 1, kind: input, shape index: {}]
  %s2 = inlined_call_operand.vmem [shape: f32[1,128], index: 2, kind: input, shape index: {}]
  %s3 = inlined_call_operand.hbm [shape: f32[8,128], index: 3, kind: output, shape index: {}]
  %s4 = sld [smem:[#allocation0]]
  $region30: #{tpu_custom_call.1} parent=0
    _
  %s6 = ssub.s32 1, %s4
  %s7 = scalar_select 0, %s6, %s4
  $region1: #{tpu_custom_call.1} parent=0
    #allocation2 [shape = 'u8[4096]{0}', space=vmem, size = 0x1000, scoped, tag = 'input window, operand 0, single buffered']
    #allocation3 [shape = 's32[1]{0}', space=sflag, size = 0x4, scoped, tag = 'scoped memory for tpu_custom_call.1']
    #allocation4 [shape = 's32[1]{0}', space=sflag, size = 0x4, scoped, tag = 'scoped memory for tpu_custom_call.1']
    #allocation5 [shape = 'u8[16384]{0}', space=vmem, size = 0x4000, scoped, tag = 'input window, operand 1, single buffered']
    #allocation6 [shape = 's32[1]{0}', space=sflag, size = 0x4, scoped, tag = 'scoped memory for tpu_custom_call.1']
    #allocation7 [shape = 'u8[4096]{0}', space=vmem, size = 0x1000, scoped, tag = 'output window, operand 0, single buffered']
    %8 = vsyncpa [#allocation3], 0
    %9 = vsyncpa [#allocation6], 0
    %10 = vsyncpa [#allocation4], 0
    // Predicated region
    $region2: #{tpu_custom_call.1} parent=1 // pred_check
      _
    $region3: #{tpu_custom_call.1} parent=1 // pred_check_branch
      %12 = sbr.rel (0) target = $region5
    $region4: #{tpu_custom_call.1} parent=1 // pred_region
      %s14 = ssub.s32 128, 128
      %15 = vsyncadd [#allocation3], %s14
      %s17 = sshll.u32 [#allocation2], 4
      %s18 = int_to_ptr.vmem [resolvable:$true] %s17
      %20 = dma.hbm_to_vmem [thread:$0]  %s0, 128, %s18, [#allocation3]
    $region5: #{tpu_custom_call.1} parent=1 // pred_fallthru
      _
    // Predicated region
    $region6: #{tpu_custom_call.1} parent=1 // pred_check
      _
    $region7: #{tpu_custom_call.1} parent=1 // pred_check_branch
      %22 = sbr.rel (0) target = $region9
    $region8: #{tpu_custom_call.1} parent=1 // pred_region
      %s24 = ssub.s32 512, 512
      %25 = vsyncadd [#allocation6], %s24
      %s26 = sshll.u32 [#allocation5], 4
      %s27 = int_to_ptr.vmem [resolvable:$true] %s26
      %32 = dma.hbm_to_vmem [thread:$0]  %s1, 512, %s27, [#allocation6], 128, 128, 8
    $region9: #{tpu_custom_call.1} parent=1 // pred_fallthru
      _
    // Predicated region
    $region10: #{tpu_custom_call.1} parent=1 // pred_check
      _
    $region11: #{tpu_custom_call.1} parent=1 // pred_check_branch
      %34 = sbr.rel (0) target = $region13
    $region12: #{tpu_custom_call.1} parent=1 // pred_region
      _
    $region13: #{tpu_custom_call.1} parent=1 // pred_fallthru
      _
    // Predicated region
    $region14: #{tpu_custom_call.1} parent=1 // pred_check
      _
    $region15: #{tpu_custom_call.1} parent=1 // pred_check_branch
      %36 = sbr.rel (0) target = $region17
    $region16: #{tpu_custom_call.1} parent=1 // pred_region
      %37 = dma.done [#allocation3], 128
    $region17: #{tpu_custom_call.1} parent=1 // pred_fallthru
      _
    // Predicated region
    $region18: #{tpu_custom_call.1} parent=1 // pred_check
      _
    $region19: #{tpu_custom_call.1} parent=1 // pred_check_branch
      %39 = sbr.rel (0) target = $region21
    $region20: #{tpu_custom_call.1} parent=1 // pred_region
      %40 = dma.done [#allocation6], 512
    $region21: #{tpu_custom_call.1} parent=1 // pred_fallthru
      _
    %v41 = vld [vmem:[#allocation2] sm:$0xff]
    %v42 = vmul.f32 %v41, %v41
    %vm43 = vcmask 261120
    %v44 = vsel %vm43, %v42, 0.0
    %45 = vadd.xlane.f32.xlu0 %v44
    %v46 = vpop.xlane.xlu0 %45
    %v47 = vld [vmem:[#allocation5] sm:$0xff]
    %v48 = vld [vmem:[#allocation5 + $0x8] sm:$0xff]
    %v49 = vld [vmem:[#allocation5 + $0x10] sm:$0xff]
    %v50 = vld [vmem:[#allocation5 + $0x18] sm:$0xff]
    %v52 = vsel %vm43, %v41, 0
    %54 = vmatprep.subr.mxu0 0.0
    %55 = vmatpush1.msra.mxu0 0.0
    %56 = vmatprep.subr.mxu0 0.0
    %57 = vmatpush1.msra.mxu0 0.0
    %58 = vmatprep.subr.mxu0 0.0
    %59 = vmatpush1.msra.mxu0 0.0
    %60 = vmatprep.subr.mxu0 0.0
    %61 = vmatpush1.msra.mxu0 0.0
    %62 = vmatprep.subr.mxu0 0.0
    %63 = vmatpush1.msra.mxu0 0.0
    %64 = vmatprep.subr.mxu0 0.0
    %65 = vmatpush1.msra.mxu0 0.0
    %66 = vmatprep.subr.mxu0 0.0
    %67 = vmatpush1.msra.mxu0 0.0
    %68 = vmatprep.subr.mxu0 0.0
    %69 = vmatpush1.msra.mxu0 0.0
    %70 = vmatprep.subr.mxu0 0.0
    %71 = vmatpush1.msra.mxu0 0.0
    %72 = vmatprep.subr.mxu0 0.0
    %73 = vmatpush1.msra.mxu0 0.0
    %74 = vmatprep.subr.mxu0 0.0
    %75 = vmatpush1.msra.mxu0 0.0
    %76 = vmatprep.subr.mxu0 0.0
    %77 = vmatpush1.msra.mxu0 0.0
    %78 = vmatprep.subr.mxu0 0.0
    %79 = vmatpush1.msra.mxu0 %v50
    %80 = vmatprep.subr.mxu0 0.0
    %81 = vmatpush1.msra.mxu0 %v49
    %82 = vmatprep.subr.mxu0 0.0
    %83 = vmatpush1.msra.mxu0 %v48
    %84 = vmatprep.subr.mxu0 0.0
    %85 = vmatpush1.msra.mxu0 %v47
    %86 = vmatprep.subr.mxu0 0.0
    %87 = vmatpush2.msra.mxu0 0.0
    %88 = vmatprep.subr.mxu0 0.0
    %89 = vmatpush2.msra.mxu0 0.0
    %90 = vmatprep.subr.mxu0 0.0
    %91 = vmatpush2.msra.mxu0 0.0
    %92 = vmatprep.subr.mxu0 0.0
    %93 = vmatpush2.msra.mxu0 0.0
    %94 = vmatprep.subr.mxu0 0.0
    %95 = vmatpush2.msra.mxu0 0.0
    %96 = vmatprep.subr.mxu0 0.0
    %97 = vmatpush2.msra.mxu0 0.0
    %98 = vmatprep.subr.mxu0 0.0
    %99 = vmatpush2.msra.mxu0 0.0
    %100 = vmatprep.subr.mxu0 0.0
    %101 = vmatpush2.msra.mxu0 0.0
    %102 = vmatprep.subr.mxu0 0.0
    %103 = vmatpush2.msra.mxu0 0.0
    %104 = vmatprep.subr.mxu0 0.0
    %105 = vmatpush2.msra.mxu0 0.0
    %106 = vmatprep.subr.mxu0 0.0
    %107 = vmatpush2.msra.mxu0 0.0
    %108 = vmatprep.subr.mxu0 0.0
    %109 = vmatpush2.msra.mxu0 0.0
    %110 = vmatprep.subr.mxu0 0.0
    %111 = vmatpush2.msra.mxu0 0.0
    %112 = vmatprep.subr.mxu0 0.0
    %113 = vmatpush2.msra.mxu0 0.0
    %114 = vmatprep.subr.mxu0 0.0
    %115 = vmatpush2.msra.mxu0 0.0
    %116 = vmatprep.subr.mxu0 0.0
    %117 = vmatpush2.msra.mxu0 0.0
    %118 = vmatprep.mubr.f32.mxu0 0.0
    %119 = vmatmul.mubr.f32.gmra.mxu0 %v52
    %v120 = vpop.f32.mrf.mxu0
    %v121 = vadd.f32 0.0, %v120
    %v122 = vpop.f32.mrf.mxu0
    %123 = vdwg.mxu0
    %v124 = vld [vmem:[%s2] sm:$0x1]
    %v126 = vlaneseq
    %v127 = vshrl.u32 %v126, 7
    %v128 = vsub.s32 0, %v127
    %v129 = vrot.slane %v124, %v128
    %v131 = vadd.f32 %v46, %v129
    %v132 = vmul.f32 %v121, 2.0
    %v133 = vsub.f32 %v131, %v132
    %v134 = vmax.f32 %v133, 0.0
    %v135 = vrsqrt.pop %v134
    %v136 = vmul.f32 %v134, %v135
    %vm137 = vcmp.eq.f32.partialorder %v134, inf
    %v138 = vsel %vm137, %v134, %v136
    %vm139 = vcmp.eq.f32.partialorder %v134, 0.0
    %v140 = vand.u32 %v134, 2147483648
    %v141 = vsel %vm139, %v140, %v138
    %142 = vst [vmem:[#allocation7] sm:$0xff] %v141
    // Predicated region
    $region22: #{tpu_custom_call.1} parent=1 // pred_check
      _
    $region23: #{tpu_custom_call.1} parent=1 // pred_check_branch
      %144 = sbr.rel (0) target = $region25
    $region24: #{tpu_custom_call.1} parent=1 // pred_region
      %s146 = ssub.s32 128, 128
      %147 = vsyncadd [#allocation4], %s146
      %s149 = sshll.u32 [#allocation7], 4
      %s150 = int_to_ptr.vmem [resolvable:$true] %s149
      %152 = dma.vmem_to_hbm [thread:$0]  %s150, 128, %s3, [#allocation4]
    $region25: #{tpu_custom_call.1} parent=1 // pred_fallthru
      _
    // Predicated region
    $region26: #{tpu_custom_call.1} parent=1 // pred_check
      _
    $region27: #{tpu_custom_call.1} parent=1 // pred_check_branch
      %154 = sbr.rel (0) target = $region29
    $region28: #{tpu_custom_call.1} parent=1 // pred_region
      %155 = dma.done [#allocation4], 128
    $region29: #{tpu_custom_call.1} parent=1 // pred_fallthru
      _
    %156 = vsyncpa [#allocation3], 1
    %157 = vsyncpa [#allocation6], 1
    %158 = vsyncpa [#allocation4], 1

</llo_original>
